<compile_context>
chip_gen: v5e
topology: v5e:2x2
jax: 0.10.0
libtpu: 0.0.40
codegen_flags: <defaults>
</compile_context>

<pallas_src>
import jax
import jax.numpy as jnp
from jax.experimental import pallas as pl
from jax.experimental.pallas import tpu as pltpu


def _round_up(a, m):
    return (a + m - 1) // m * m


def _vae_kernel(x_ref, w1e_ref, w2e_ref, wms_ref, wd1_ref, wd2_ref, b_ref,
                out_ref):
    """Fully fused VAE forward for one batch tile.

    Weight layout (all pre-transposed to (in, out)):
      w1e : (S*F, 2H)  encoder.linear1
      w2e : (2H,  H)   encoder.linear2
      wms : (H,  2L)   [encoder.fc_mu | encoder.fc_sigma]  (lane-concat)
      wd1 : (L,  2H)   decoder.fc folded into decoder.linear1
      wd2 : (2H, S*F)  decoder.linear2
      b   : (5, maxW)  row-packed biases (zero-padded):
            row0 enc.l1(2H), row1 enc.l2(H), row2 [mu|sigma](2L),
            row3 folded dec(2H), row4 dec.l2(S*F)

    Output: single lane-dense slab (TB, SF + 2L) = [recon | mu | sigma].
    """
    IH = w1e_ref.shape[1]
    H = w2e_ref.shape[1]
    L2 = wms_ref.shape[1]
    SF = wd2_ref.shape[1]
    cdt = w1e_ref.dtype  # matmul input dtype (f32 or bf16); accumulation is f32

    x = x_ref[...].astype(cdt)

    # ---------------- Encoder ----------------
    h = jnp.dot(x, w1e_ref[...], preferred_element_type=jnp.float32) + b_ref[0:1, :IH]
    h = jnp.maximum(h, 0.0).astype(cdt)                       # relu
    h = jnp.dot(h, w2e_ref[...], preferred_element_type=jnp.float32) + b_ref[1:2, :H]
    h = jnp.maximum(h, 0.0).astype(cdt)                       # relu
    musig = jnp.dot(h, wms_ref[...], preferred_element_type=jnp.float32) + b_ref[2:3, :L2]

    # ---------------- Decoder (from mu) ----------------
    # NOTE: the lane split at L2//2 is a single-vreg select at small L; if
    # latent_size is scaled up, align L to a 128-lane boundary to keep it free.
    mu = musig[:, : L2 // 2].astype(cdt)
    d = jnp.dot(mu, wd1_ref[...], preferred_element_type=jnp.float32) + b_ref[3:4, :IH]
    d = jnp.maximum(d, 0.0).astype(cdt)                       # relu
    d = jnp.dot(d, wd2_ref[...], preferred_element_type=jnp.float32) + b_ref[4:5, :SF]
    recon = jnp.tanh(d)                                       # tanh

    # One lane-dense store: [recon | mu | sigma]
    out_ref[...] = jnp.concatenate([recon, musig], axis=-1)


def init_params(key, sequence_length, hidden_size, feature_size, latent_size,
                dtype=jnp.float32):
    """Deterministic parameter init matching the PyTorch module's shapes.

    Weights are stored transposed relative to nn.Linear, i.e. (in, out).
    Biases are stored as (1, out).
    """
    S, H, F, L = sequence_length, hidden_size, feature_size, latent_size
    IH = 2 * H
    SF = S * F

    def lin(k, fan_in, fan_out):
        kw, kb = jax.random.split(k)
        bound = 1.0 / jnp.sqrt(fan_in)
        w = jax.random.uniform(kw, (fan_in, fan_out), dtype, -bound, bound)
        b = jax.random.uniform(kb, (1, fan_out), dtype, -bound, bound)
        return w, b

    keys = jax.random.split(key, 7)
    params = {}
    params["enc_l1"] = lin(keys[0], SF, IH)   # encoder.linear1
    params["enc_l2"] = lin(keys[1], IH, H)    # encoder.linear2
    params["enc_mu"] = lin(keys[2], H, L)     # encoder.fc_mu
    params["enc_sg"] = lin(keys[3], H, L)     # encoder.fc_sigma
    params["dec_fc"] = lin(keys[4], L, H)     # decoder.fc
    params["dec_l1"] = lin(keys[5], H, IH)    # decoder.linear1
    params["dec_l2"] = lin(keys[6], IH, SF)   # decoder.linear2
    return params


def autoencoder_forward(x, params, sequence_length, hidden_size, feature_size,
                        latent_size, compute_dtype=jnp.float32):
    """x: (B, S, F).  Returns (reconstructed_x, (mu, sigma))."""
    S, H, F, L = sequence_length, hidden_size, feature_size, latent_size
    IH, SF, L2 = 2 * H, S * F, 2 * L
    B = x.shape[0]
    cdt = jnp.dtype(compute_dtype)

    # Cast x on the host: halves the x HBM read + VMEM tile in the bf16 path.
    x_flat = x.reshape(B, SF).astype(cdt)

    w1e, b1e = params["enc_l1"]
    w2e, b2e = params["enc_l2"]
    wmu, bmu = params["enc_mu"]
    wsg, bsg = params["enc_sg"]
    wfc, bfc = params["dec_fc"]
    w1d, b1d = params["dec_l1"]
    w2d, b2d = params["dec_l2"]

    # --- host-side algebraic fusions (done in f32, constant-folded under jit) ---
    wms = jnp.concatenate([wmu, wsg], axis=1)          # (H, 2L)
    bms = jnp.concatenate([bmu, bsg], axis=1)          # (1, 2L)
    wd1 = wfc @ w1d                                    # (L, 2H)  fc folded into linear1
    bd1 = bfc @ w1d + b1d                              # (1, 2H)

    weights = [w.astype(cdt) for w in (w1e, w2e, wms, wd1, w2d)]

    # --- pack all biases into a single row-padded f32 operand ---
    maxW = max(IH, H, L2, SF)

    def _row(b):
        return jnp.pad(b, ((0, 0), (0, maxW - b.shape[1])))

    b_pack = jnp.concatenate(
        [_row(b) for b in (b1e, b2e, bms, bd1, b2d)], axis=0).astype(jnp.float32)

    # --- batch-tile selection with explicit per-generation VMEM accounting ---
    x_item = cdt.itemsize
    align = 16 if x_item < 4 else 8                    # bf16 packs 16 rows per vreg
    try:
        vmem_cap = int(pltpu.get_tpu_info().vmem_capacity_bytes)
    except Exception:
        vmem_cap = 64 << 20                            # conservative: v7x per-core VMEM

    w_bytes = sum(int(w.size) for w in weights) * x_item + int(b_pack.size) * 4
    # Per-row VMEM: double-buffered x tile + double-buffered output slab
    # + f32 activation temporaries through the chain.
    per_row = (2 * SF * x_item + 2 * (SF + L2) * 4
               + (2 * IH + H + L2 + L + 2 * SF) * 4)
    budget = min(int(0.70 * vmem_cap), 96 << 20)       # ~44 MiB on v7x, ~90 MiB on v5e/v6e

    def _pick_tb(weight_buf_factor):
        fixed = weight_buf_factor * w_bytes + (2 << 20)      # weights + headroom
        tb_fit = max(align, (budget - fixed) // per_row // align * align)
        tb_fit = min(tb_fit, 512)                            # sweepable upper bound
        tb_batch = _round_up(B, align)                       # never exceed the batch
        # Keep >= 2 grid steps when the batch allows it (both v7x TensorCores).
        tb_mc = _round_up(pl.cdiv(B, 2), align) if B >= 2 * align else tb_batch
        tb = max(align, min(tb_fit, tb_batch, tb_mc))
        return tb, fixed

    def _run(single_buffer_weights):
        TB, fixed = _pick_tb(1 if single_buffer_weights else 2)
        nb = pl.cdiv(B, TB)
        rows = nb * TB
        footprint = fixed + TB * per_row
        vmem_limit = int(min(budget, max(4 << 20, 2 * footprint)))

        if single_buffer_weights:
            # Grid-invariant operands: single-buffer them (halves weight VMEM).
            def wspec(a):
                return pl.BlockSpec(a.shape, lambda i: (0, 0),
                                    pipeline_mode=pl.Buffered(1))
        else:
            def wspec(a):
                return pl.BlockSpec(a.shape, lambda i: (0, 0))

        in_specs = ([pl.BlockSpec((TB, SF), lambda i: (i, 0))]
                    + [wspec(w) for w in weights] + [wspec(b_pack)])
        out_spec = pl.BlockSpec((TB, SF + L2), lambda i: (i, 0))
        out_shape = jax.ShapeDtypeStruct((B, SF + L2), jnp.float32)

        flops = 2 * rows * (SF * IH + IH * H + H * L2 + L * IH + IH * SF)
        bytes_accessed = B * SF * x_item + B * (SF + L2) * 4 + w_bytes
        cost = pl.CostEstimate(flops=flops, transcendentals=rows * SF,
                               bytes_accessed=bytes_accessed)

        return pl.pallas_call(
            _vae_kernel,
            grid=(nb,),
            in_specs=in_specs,
            out_specs=out_spec,
            out_shape=out_shape,
            compiler_params=pltpu.CompilerParams(
                dimension_semantics=("parallel",),
                vmem_limit_bytes=vmem_limit),
            cost_estimate=cost,
        )(x_flat, *weights, b_pack)

    try:
        out = _run(single_buffer_weights=True)
    except Exception:
        # pipeline_mode=pl.Buffered may be unavailable on this JAX version;
        # fall back to default (double-buffered) grid-invariant specs.
        out = _run(single_buffer_weights=False)

    reconstructed_x = out[:, :SF].reshape(B, S, F)
    mu = out[:, SF:SF + L]
    sigma = out[:, SF + L:]
    return reconstructed_x, (mu, sigma)


def _reference_forward(x, params, S, H, F, L):
    """Pure-JAX f32 reference mirroring the (fixed) PyTorch forward."""
    B = x.shape[0]
    h = x.reshape(B, S * F)
    h = jnp.maximum(h @ params["enc_l1"][0] + params["enc_l1"][1], 0.0)
    h = jnp.maximum(h @ params["enc_l2"][0] + params["enc_l2"][1], 0.0)
    mu = h @ params["enc_mu"][0] + params["enc_mu"][1]
    sigma = h @ params["enc_sg"][0] + params["enc_sg"][1]
    d = mu @ params["dec_fc"][0] + params["dec_fc"][1]
    d = jnp.maximum(d @ params["dec_l1"][0] + params["dec_l1"][1], 0.0)
    d = jnp.tanh(d @ params["dec_l2"][0] + params["dec_l2"][1])
    return d.reshape(B, S, F), (mu, sigma)


if __name__ == "__main__":
    # Small shapes consistent with the module's forward.
    B = 2           # batch
    S = 8           # sequence_length
    F = 4           # feature_size
    H = 32          # hidden_size
    L = 16          # latent_size

    key = jax.random.PRNGKey(0)
    k_x, k_p = jax.random.split(key)
    x = jax.random.normal(k_x, (B, S, F), dtype=jnp.float32)
    params = init_params(k_p, S, H, F, L)

    recon_ref, (mu_ref, sigma_ref) = _reference_forward(x, params, S, H, F, L)

    # ---- f32 compute path (tight check) ----
    recon, (mu, sigma) = autoencoder_forward(x, params, S, H, F, L,
                                             compute_dtype=jnp.float32)
    jax.block_until_ready((recon, mu, sigma))
    assert recon.shape == (B, S, F)
    assert mu.shape == (B, L) and sigma.shape == (B, L)
    assert jnp.allclose(recon, recon_ref, atol=1e-4, rtol=1e-4)
    assert jnp.allclose(mu, mu_ref, atol=1e-4, rtol=1e-4)
    assert jnp.allclose(sigma, sigma_ref, atol=1e-4, rtol=1e-4)

    # ---- bf16 matmul-input path (MXU-native; relaxed tolerance) ----
    recon_b, (mu_b, sigma_b) = autoencoder_forward(x, params, S, H, F, L,
                                                   compute_dtype=jnp.bfloat16)
    jax.block_until_ready((recon_b, mu_b, sigma_b))
    assert jnp.allclose(recon_b, recon_ref, atol=5e-2, rtol=5e-2)
    assert jnp.allclose(mu_b, mu_ref, atol=5e-2, rtol=5e-2)
    assert jnp.allclose(sigma_b, sigma_ref, atol=5e-2, rtol=5e-2)

    print("KERNEL_OK")
</pallas_src>

<mosaic_0001>
module attributes {stable_mosaic.version = 11 : i64} {
  func.func @_vae_kernel(%arg0: i32, %arg1: memref<8x32xf32, #tpu.memory_space<vmem>>, %arg2: memref<32x64xf32, #tpu.memory_space<vmem>>, %arg3: memref<64x32xf32, #tpu.memory_space<vmem>>, %arg4: memref<32x32xf32, #tpu.memory_space<vmem>>, %arg5: memref<16x64xf32, #tpu.memory_space<vmem>>, %arg6: memref<64x32xf32, #tpu.memory_space<vmem>>, %arg7: memref<5x64xf32, #tpu.memory_space<vmem>>, %arg8: memref<8x64xf32, #tpu.memory_space<vmem>>) attributes {dimension_semantics = [#tpu.dimension_semantics<parallel>], iteration_bounds = array<i64: 1>, scalar_prefetch = 0 : i64, scratch_operands = 0 : i64, tpu.core_type = #tpu.core_type<tc>, window_params = [{transform_indices = @transform_0, window_bounds = array<i64: 8, 32>}, {pipeline_mode = #tpu.pipeline_mode<synchronous>, transform_indices = @transform_1, window_bounds = array<i64: 32, 64>}, {pipeline_mode = #tpu.pipeline_mode<synchronous>, transform_indices = @transform_2, window_bounds = array<i64: 64, 32>}, {pipeline_mode = #tpu.pipeline_mode<synchronous>, transform_indices = @transform_3, window_bounds = array<i64: 32, 32>}, {pipeline_mode = #tpu.pipeline_mode<synchronous>, transform_indices = @transform_4, window_bounds = array<i64: 16, 64>}, {pipeline_mode = #tpu.pipeline_mode<synchronous>, transform_indices = @transform_5, window_bounds = array<i64: 64, 32>}, {pipeline_mode = #tpu.pipeline_mode<synchronous>, transform_indices = @transform_6, window_bounds = array<i64: 5, 64>}, {transform_indices = @transform_7, window_bounds = array<i64: 8, 64>}]} {
    %c0 = arith.constant 0 : index
    %c0_0 = arith.constant 0 : index
    %0 = vector.load %arg1[%c0, %c0_0] : memref<8x32xf32, #tpu.memory_space<vmem>>, vector<8x32xf32>
    %c0_1 = arith.constant 0 : index
    %c0_2 = arith.constant 0 : index
    %1 = vector.load %arg2[%c0_1, %c0_2] : memref<32x64xf32, #tpu.memory_space<vmem>>, vector<32x64xf32>
    %cst = arith.constant dense<0.000000e+00> : vector<8x64xf32>
    %2 = tpu.matmul %0, %1, %cst {dimension_numbers = #tpu.dot_dimension_numbers<[1], [0], [0], [1], [0, 0, 1, 1], [], []>} : vector<8x32xf32>, vector<32x64xf32>, vector<8x64xf32> -> vector<8x64xf32>
    %c0_3 = arith.constant 0 : index
    %c0_4 = arith.constant 0 : index
    %3 = vector.load %arg7[%c0_3, %c0_4] : memref<5x64xf32, #tpu.memory_space<vmem>>, vector<1x64xf32>
    %4 = vector.broadcast %3 : vector<1x64xf32> to vector<8x64xf32>
    %5 = arith.addf %2, %4 : vector<8x64xf32>
    %cst_5 = arith.constant 0.000000e+00 : f32
    %6 = vector.broadcast %cst_5 : f32 to vector<8x64xf32>
    %7 = arith.maximumf %5, %6 : vector<8x64xf32>
    %c0_6 = arith.constant 0 : index
    %c0_7 = arith.constant 0 : index
    %8 = vector.load %arg3[%c0_6, %c0_7] : memref<64x32xf32, #tpu.memory_space<vmem>>, vector<64x32xf32>
    %cst_8 = arith.constant dense<0.000000e+00> : vector<8x32xf32>
    %9 = tpu.matmul %7, %8, %cst_8 {dimension_numbers = #tpu.dot_dimension_numbers<[1], [0], [0], [1], [0, 0, 1, 1], [], []>} : vector<8x64xf32>, vector<64x32xf32>, vector<8x32xf32> -> vector<8x32xf32>
    %c1 = arith.constant 1 : index
    %c0_9 = arith.constant 0 : index
    %10 = vector.load %arg7[%c1, %c0_9] : memref<5x64xf32, #tpu.memory_space<vmem>>, vector<1x32xf32>
    %11 = vector.broadcast %10 : vector<1x32xf32> to vector<8x32xf32>
    %12 = arith.addf %9, %11 : vector<8x32xf32>
    %cst_10 = arith.constant 0.000000e+00 : f32
    %13 = vector.broadcast %cst_10 : f32 to vector<8x32xf32>
    %14 = arith.maximumf %12, %13 : vector<8x32xf32>
    %c0_11 = arith.constant 0 : index
    %c0_12 = arith.constant 0 : index
    %15 = vector.load %arg4[%c0_11, %c0_12] : memref<32x32xf32, #tpu.memory_space<vmem>>, vector<32x32xf32>
    %cst_13 = arith.constant dense<0.000000e+00> : vector<8x32xf32>
    %16 = tpu.matmul %14, %15, %cst_13 {dimension_numbers = #tpu.dot_dimension_numbers<[1], [0], [0], [1], [0, 0, 1, 1], [], []>} : vector<8x32xf32>, vector<32x32xf32>, vector<8x32xf32> -> vector<8x32xf32>
    %c2 = arith.constant 2 : index
    %c0_14 = arith.constant 0 : index
    %17 = vector.load %arg7[%c2, %c0_14] : memref<5x64xf32, #tpu.memory_space<vmem>>, vector<1x32xf32>
    %18 = vector.broadcast %17 : vector<1x32xf32> to vector<8x32xf32>
    %19 = arith.addf %16, %18 : vector<8x32xf32>
    %20 = vector.extract_strided_slice %19 {offsets = [0, 0], sizes = [8, 16], strides = [1, 1]} : vector<8x32xf32> to vector<8x16xf32>
    %c0_15 = arith.constant 0 : index
    %c0_16 = arith.constant 0 : index
    %21 = vector.load %arg5[%c0_15, %c0_16] : memref<16x64xf32, #tpu.memory_space<vmem>>, vector<16x64xf32>
    %cst_17 = arith.constant dense<0.000000e+00> : vector<8x64xf32>
    %22 = tpu.matmul %20, %21, %cst_17 {dimension_numbers = #tpu.dot_dimension_numbers<[1], [0], [0], [1], [0, 0, 1, 1], [], []>} : vector<8x16xf32>, vector<16x64xf32>, vector<8x64xf32> -> vector<8x64xf32>
    %c3 = arith.constant 3 : index
    %c0_18 = arith.constant 0 : index
    %23 = vector.load %arg7[%c3, %c0_18] : memref<5x64xf32, #tpu.memory_space<vmem>>, vector<1x64xf32>
    %24 = vector.broadcast %23 : vector<1x64xf32> to vector<8x64xf32>
    %25 = arith.addf %22, %24 : vector<8x64xf32>
    %cst_19 = arith.constant 0.000000e+00 : f32
    %26 = vector.broadcast %cst_19 : f32 to vector<8x64xf32>
    %27 = arith.maximumf %25, %26 : vector<8x64xf32>
    %c0_20 = arith.constant 0 : index
    %c0_21 = arith.constant 0 : index
    %28 = vector.load %arg6[%c0_20, %c0_21] : memref<64x32xf32, #tpu.memory_space<vmem>>, vector<64x32xf32>
    %cst_22 = arith.constant dense<0.000000e+00> : vector<8x32xf32>
    %29 = tpu.matmul %27, %28, %cst_22 {dimension_numbers = #tpu.dot_dimension_numbers<[1], [0], [0], [1], [0, 0, 1, 1], [], []>} : vector<8x64xf32>, vector<64x32xf32>, vector<8x32xf32> -> vector<8x32xf32>
    %c4 = arith.constant 4 : index
    %c0_23 = arith.constant 0 : index
    %30 = vector.load %arg7[%c4, %c0_23] : memref<5x64xf32, #tpu.memory_space<vmem>>, vector<1x32xf32>
    %31 = vector.broadcast %30 : vector<1x32xf32> to vector<8x32xf32>
    %32 = arith.addf %29, %31 : vector<8x32xf32>
    %33 = math.tanh %32 : vector<8x32xf32>
    %34 = tpu.concatenate %33, %19 in 1 : vector<8x32xf32>, vector<8x32xf32> -> vector<8x64xf32>
    %c0_24 = arith.constant 0 : index
    %c0_25 = arith.constant 0 : index
    %35 = vector.load %arg8[%c0_24, %c0_25] : memref<8x64xf32, #tpu.memory_space<vmem>>, vector<8x64xf32>
    tpu.vector_store %arg8[%c0_24, %c0_25], %34 {strides = array<i32>} : memref<8x64xf32, #tpu.memory_space<vmem>>, vector<8x64xf32>,
    return
  }
  func.func @transform_0(%arg0: i32) -> (i32, i32) {
    %c0_i32 = arith.constant 0 : i32
    %c0_i32_0 = arith.constant 0 : i32
    return %arg0, %c0_i32 : i32, i32
  }
  func.func @transform_1(%arg0: i32) -> (i32, i32) {
    %c0_i32 = arith.constant 0 : i32
    %c0_i32_0 = arith.constant 0 : i32
    %c0_i32_1 = arith.constant 0 : i32
    return %c0_i32, %c0_i32_0 : i32, i32
  }
  func.func @transform_2(%arg0: i32) -> (i32, i32) {
    %c0_i32 = arith.constant 0 : i32
    %c0_i32_0 = arith.constant 0 : i32
    %c0_i32_1 = arith.constant 0 : i32
    return %c0_i32, %c0_i32_0 : i32, i32
  }
  func.func @transform_3(%arg0: i32) -> (i32, i32) {
    %c0_i32 = arith.constant 0 : i32
    %c0_i32_0 = arith.constant 0 : i32
    %c0_i32_1 = arith.constant 0 : i32
    return %c0_i32, %c0_i32_0 : i32, i32
  }
  func.func @transform_4(%arg0: i32) -> (i32, i32) {
    %c0_i32 = arith.constant 0 : i32
    %c0_i32_0 = arith.constant 0 : i32
    %c0_i32_1 = arith.constant 0 : i32
    return %c0_i32, %c0_i32_0 : i32, i32
  }
  func.func @transform_5(%arg0: i32) -> (i32, i32) {
    %c0_i32 = arith.constant 0 : i32
    %c0_i32_0 = arith.constant 0 : i32
    %c0_i32_1 = arith.constant 0 : i32
    return %c0_i32, %c0_i32_0 : i32, i32
  }
  func.func @transform_6(%arg0: i32) -> (i32, i32) {
    %c0_i32 = arith.constant 0 : i32
    %c0_i32_0 = arith.constant 0 : i32
    %c0_i32_1 = arith.constant 0 : i32
    return %c0_i32, %c0_i32_0 : i32, i32
  }
  func.func @transform_7(%arg0: i32) -> (i32, i32) {
    %c0_i32 = arith.constant 0 : i32
    %c0_i32_0 = arith.constant 0 : i32
    return %arg0, %c0_i32 : i32, i32
  }
}

module attributes {stable_mosaic.version = 11 : i64} {
  func.func @_vae_kernel(%arg0: i32, %arg1: memref<8x32xf32, #tpu.memory_space<vmem>>, %arg2: memref<32x64xf32, #tpu.memory_space<vmem>>, %arg3: memref<64x32xf32, #tpu.memory_space<vmem>>, %arg4: memref<32x32xf32, #tpu.memory_space<vmem>>, %arg5: memref<16x64xf32, #tpu.memory_space<vmem>>, %arg6: memref<64x32xf32, #tpu.memory_space<vmem>>, %arg7: memref<5x64xf32, #tpu.memory_space<vmem>>, %arg8: memref<8x64xf32, #tpu.memory_space<vmem>>) attributes {dimension_semantics = [#tpu.dimension_semantics<parallel>], iteration_bounds = array<i64: 1>, scalar_prefetch = 0 : i64, scratch_operands = 0 : i64, tpu.core_type = #tpu.core_type<tc>, window_params = [{transform_indices = @transform_0, window_bounds = array<i64: 8, 32>}, {pipeline_mode = #tpu.pipeline_mode<synchronous>, transform_indices = @transform_1, window_bounds = array<i64: 32, 64>}, {pipeline_mode = #tpu.pipeline_mode<synchronous>, transform_indices = @transform_2, window_bounds = array<i64: 64, 32>}, {pipeline_mode = #tpu.pipeline_mode<synchronous>, transform_indices = @transform_3, window_bounds = array<i64: 32, 32>}, {pipeline_mode = #tpu.pipeline_mode<synchronous>, transform_indices = @transform_4, window_bounds = array<i64: 16, 64>}, {pipeline_mode = #tpu.pipeline_mode<synchronous>, transform_indices = @transform_5, window_bounds = array<i64: 64, 32>}, {pipeline_mode = #tpu.pipeline_mode<synchronous>, transform_indices = @transform_6, window_bounds = array<i64: 5, 64>}, {transform_indices = @transform_7, window_bounds = array<i64: 8, 64>}]} {
    %c0 = arith.constant 0 : index
    %c0_0 = arith.constant 0 : index
    %0 = vector.load %arg1[%c0, %c0_0] : memref<8x32xf32, #tpu.memory_space<vmem>>, vector<8x32xf32>
    %c0_1 = arith.constant 0 : index
    %c0_2 = arith.constant 0 : index
    %1 = vector.load %arg2[%c0_1, %c0_2] : memref<32x64xf32, #tpu.memory_space<vmem>>, vector<32x64xf32>
    %cst = arith.constant dense<0.000000e+00> : vector<8x64xf32>
    %2 = tpu.matmul %0, %1, %cst {dimension_numbers = #tpu.dot_dimension_numbers<[1], [0], [0], [1], [0, 0, 1, 1], [], []>} : vector<8x32xf32>, vector<32x64xf32>, vector<8x64xf32> -> vector<8x64xf32>
    %c0_3 = arith.constant 0 : index
    %c0_4 = arith.constant 0 : index
    %3 = vector.load %arg7[%c0_3, %c0_4] : memref<5x64xf32, #tpu.memory_space<vmem>>, vector<1x64xf32>
    %4 = vector.broadcast %3 : vector<1x64xf32> to vector<8x64xf32>
    %5 = arith.addf %2, %4 : vector<8x64xf32>
    %cst_5 = arith.constant 0.000000e+00 : f32
    %6 = vector.broadcast %cst_5 : f32 to vector<8x64xf32>
    %7 = arith.maximumf %5, %6 : vector<8x64xf32>
    %c0_6 = arith.constant 0 : index
    %c0_7 = arith.constant 0 : index
    %8 = vector.load %arg3[%c0_6, %c0_7] : memref<64x32xf32, #tpu.memory_space<vmem>>, vector<64x32xf32>
    %cst_8 = arith.constant dense<0.000000e+00> : vector<8x32xf32>
    %9 = tpu.matmul %7, %8, %cst_8 {dimension_numbers = #tpu.dot_dimension_numbers<[1], [0], [0], [1], [0, 0, 1, 1], [], []>} : vector<8x64xf32>, vector<64x32xf32>, vector<8x32xf32> -> vector<8x32xf32>
    %c1 = arith.constant 1 : index
    %c0_9 = arith.constant 0 : index
    %10 = vector.load %arg7[%c1, %c0_9] : memref<5x64xf32, #tpu.memory_space<vmem>>, vector<1x32xf32>
    %11 = vector.broadcast %10 : vector<1x32xf32> to vector<8x32xf32>
    %12 = arith.addf %9, %11 : vector<8x32xf32>
    %cst_10 = arith.constant 0.000000e+00 : f32
    %13 = vector.broadcast %cst_10 : f32 to vector<8x32xf32>
    %14 = arith.maximumf %12, %13 : vector<8x32xf32>
    %c0_11 = arith.constant 0 : index
    %c0_12 = arith.constant 0 : index
    %15 = vector.load %arg4[%c0_11, %c0_12] : memref<32x32xf32, #tpu.memory_space<vmem>>, vector<32x32xf32>
    %cst_13 = arith.constant dense<0.000000e+00> : vector<8x32xf32>
    %16 = tpu.matmul %14, %15, %cst_13 {dimension_numbers = #tpu.dot_dimension_numbers<[1], [0], [0], [1], [0, 0, 1, 1], [], []>} : vector<8x32xf32>, vector<32x32xf32>, vector<8x32xf32> -> vector<8x32xf32>
    %c2 = arith.constant 2 : index
    %c0_14 = arith.constant 0 : index
    %17 = vector.load %arg7[%c2, %c0_14] : memref<5x64xf32, #tpu.memory_space<vmem>>, vector<1x32xf32>
    %18 = vector.broadcast %17 : vector<1x32xf32> to vector<8x32xf32>
    %19 = arith.addf %16, %18 : vector<8x32xf32>
    %20 = vector.extract_strided_slice %19 {offsets = [0, 0], sizes = [8, 16], strides = [1, 1]} : vector<8x32xf32> to vector<8x16xf32>
    %c0_15 = arith.constant 0 : index
    %c0_16 = arith.constant 0 : index
    %21 = vector.load %arg5[%c0_15, %c0_16] : memref<16x64xf32, #tpu.memory_space<vmem>>, vector<16x64xf32>
    %cst_17 = arith.constant dense<0.000000e+00> : vector<8x64xf32>
    %22 = tpu.matmul %20, %21, %cst_17 {dimension_numbers = #tpu.dot_dimension_numbers<[1], [0], [0], [1], [0, 0, 1, 1], [], []>} : vector<8x16xf32>, vector<16x64xf32>, vector<8x64xf32> -> vector<8x64xf32>
    %c3 = arith.constant 3 : index
    %c0_18 = arith.constant 0 : index
    %23 = vector.load %arg7[%c3, %c0_18] : memref<5x64xf32, #tpu.memory_space<vmem>>, vector<1x64xf32>
    %24 = vector.broadcast %23 : vector<1x64xf32> to vector<8x64xf32>
    %25 = arith.addf %22, %24 : vector<8x64xf32>
    %cst_19 = arith.constant 0.000000e+00 : f32
    %26 = vector.broadcast %cst_19 : f32 to vector<8x64xf32>
    %27 = arith.maximumf %25, %26 : vector<8x64xf32>
    %c0_20 = arith.constant 0 : index
    %c0_21 = arith.constant 0 : index
    %28 = vector.load %arg6[%c0_20, %c0_21] : memref<64x32xf32, #tpu.memory_space<vmem>>, vector<64x32xf32>
    %cst_22 = arith.constant dense<0.000000e+00> : vector<8x32xf32>
    %29 = tpu.matmul %27, %28, %cst_22 {dimension_numbers = #tpu.dot_dimension_numbers<[1], [0], [0], [1], [0, 0, 1, 1], [], []>} : vector<8x64xf32>, vector<64x32xf32>, vector<8x32xf32> -> vector<8x32xf32>
    %c4 = arith.constant 4 : index
    %c0_23 = arith.constant 0 : index
    %30 = vector.load %arg7[%c4, %c0_23] : memref<5x64xf32, #tpu.memory_space<vmem>>, vector<1x32xf32>
    %31 = vector.broadcast %30 : vector<1x32xf32> to vector<8x32xf32>
    %32 = arith.addf %29, %31 : vector<8x32xf32>
    %33 = math.tanh %32 : vector<8x32xf32>
    %34 = tpu.concatenate %33, %19 in 1 : vector<8x32xf32>, vector<8x32xf32> -> vector<8x64xf32>
    %c0_24 = arith.constant 0 : index
    %c0_25 = arith.constant 0 : index
    %35 = vector.load %arg8[%c0_24, %c0_25] : memref<8x64xf32, #tpu.memory_space<vmem>>, vector<8x64xf32>
    tpu.vector_store %arg8[%c0_24, %c0_25], %34 {strides = array<i32>} : memref<8x64xf32, #tpu.memory_space<vmem>>, vector<8x64xf32>,
    return
  }
  func.func @transform_0(%arg0: i32) -> (i32, i32) {
    %c0_i32 = arith.constant 0 : i32
    %c0_i32_0 = arith.constant 0 : i32
    return %arg0, %c0_i32 : i32, i32
  }
  func.func @transform_1(%arg0: i32) -> (i32, i32) {
    %c0_i32 = arith.constant 0 : i32
    %c0_i32_0 = arith.constant 0 : i32
    %c0_i32_1 = arith.constant 0 : i32
    return %c0_i32, %c0_i32_0 : i32, i32
  }
  func.func @transform_2(%arg0: i32) -> (i32, i32) {
    %c0_i32 = arith.constant 0 : i32
    %c0_i32_0 = arith.constant 0 : i32
    %c0_i32_1 = arith.constant 0 : i32
    return %c0_i32, %c0_i32_0 : i32, i32
  }
  func.func @transform_3(%arg0: i32) -> (i32, i32) {
    %c0_i32 = arith.constant 0 : i32
    %c0_i32_0 = arith.constant 0 : i32
    %c0_i32_1 = arith.constant 0 : i32
    return %c0_i32, %c0_i32_0 : i32, i32
  }
  func.func @transform_4(%arg0: i32) -> (i32, i32) {
    %c0_i32 = arith.constant 0 : i32
    %c0_i32_0 = arith.constant 0 : i32
    %c0_i32_1 = arith.constant 0 : i32
    return %c0_i32, %c0_i32_0 : i32, i32
  }
  func.func @transform_5(%arg0: i32) -> (i32, i32) {
    %c0_i32 = arith.constant 0 : i32
    %c0_i32_0 = arith.constant 0 : i32
    %c0_i32_1 = arith.constant 0 : i32
    return %c0_i32, %c0_i32_0 : i32, i32
  }
  func.func @transform_6(%arg0: i32) -> (i32, i32) {
    %c0_i32 = arith.constant 0 : i32
    %c0_i32_0 = arith.constant 0 : i32
    %c0_i32_1 = arith.constant 0 : i32
    return %c0_i32, %c0_i32_0 : i32, i32
  }
  func.func @transform_7(%arg0: i32) -> (i32, i32) {
    %c0_i32 = arith.constant 0 : i32
    %c0_i32_0 = arith.constant 0 : i32
    return %arg0, %c0_i32 : i32, i32
  }
}

</mosaic_0001>

<llo_original>
// kernel: tpu_custom_call.1
$region0: #{tpu_custom_call.1}
  #allocation0 [shape = 'u32[]', space=smem, size = 0x4, offset = 0x4, fixed_abs, tag = 'smem constant byte address 0x4 - core index']
  #allocation1 [shape = 'u32[72,128]{1,0:T(1,128)}', space=vmem, size = 0x9000, scoped, tag = 'internal scratch']
  %s0 = inlined_call_operand.vmem [shape: f32[2,32], index: 0, kind: input, shape index: {}]
  %s1 = inlined_call_operand.vmem [shape: f32[32,64], index: 1, kind: input, shape index: {}]
  %s2 = inlined_call_operand.vmem [shape: f32[64,32], index: 2, kind: input, shape index: {}]
  %s3 = inlined_call_operand.vmem [shape: f32[32,32], index: 3, kind: input, shape index: {}]
  %s4 = inlined_call_operand.vmem [shape: f32[16,64], index: 4, kind: input, shape index: {}]
  %s5 = inlined_call_operand.vmem [shape: f32[64,32], index: 5, kind: input, shape index: {}]
  %s6 = inlined_call_operand.vmem [shape: f32[5,64], index: 6, kind: input, shape index: {}]
  %s7 = inlined_call_operand.hbm [shape: f32[2,64], index: 7, kind: output, shape index: {}]
  %s8 = sld [smem:[#allocation0]]
  $region38: #{tpu_custom_call.1} parent=0
    _
  %s10 = ssub.s32 1, %s8
  %s11 = scalar_select 0, %s10, %s8
  $region1: #{tpu_custom_call.1} parent=0
    #allocation2 [shape = 'u8[4096]{0}', space=vmem, size = 0x1000, scoped, tag = 'output window, operand 0, single buffered']
    #allocation3 [shape = 's32[1]{0}', space=sflag, size = 0x4, scoped, tag = 'scoped memory for tpu_custom_call.1']
    %12 = vsyncpa [#allocation3], 0
    // Predicated region
    $region2: #{tpu_custom_call.1} parent=1 // pred_check
      _
    $region3: #{tpu_custom_call.1} parent=1 // pred_check_branch
      %14 = sbr.rel (0) target = $region5
    $region4: #{tpu_custom_call.1} parent=1 // pred_region
      _
    $region5: #{tpu_custom_call.1} parent=1 // pred_fallthru
      _
    // Predicated region
    $region6: #{tpu_custom_call.1} parent=1 // pred_check
      _
    $region7: #{tpu_custom_call.1} parent=1 // pred_check_branch
      %16 = sbr.rel (0) target = $region9
    $region8: #{tpu_custom_call.1} parent=1 // pred_region
      _
    $region9: #{tpu_custom_call.1} parent=1 // pred_fallthru
      _
    // Predicated region
    $region10: #{tpu_custom_call.1} parent=1 // pred_check
      _
    $region11: #{tpu_custom_call.1} parent=1 // pred_check_branch
      %18 = sbr.rel (0) target = $region13
    $region12: #{tpu_custom_call.1} parent=1 // pred_region
      _
    $region13: #{tpu_custom_call.1} parent=1 // pred_fallthru
      _
    // Predicated region
    $region14: #{tpu_custom_call.1} parent=1 // pred_check
      _
    $region15: #{tpu_custom_call.1} parent=1 // pred_check_branch
      %20 = sbr.rel (0) target = $region17
    $region16: #{tpu_custom_call.1} parent=1 // pred_region
      _
    $region17: #{tpu_custom_call.1} parent=1 // pred_fallthru
      _
    // Predicated region
    $region18: #{tpu_custom_call.1} parent=1 // pred_check
      _
    $region19: #{tpu_custom_call.1} parent=1 // pred_check_branch
      %22 = sbr.rel (0) target = $region21
    $region20: #{tpu_custom_call.1} parent=1 // pred_region
      _
    $region21: #{tpu_custom_call.1} parent=1 // pred_fallthru
      _
    // Predicated region
    $region22: #{tpu_custom_call.1} parent=1 // pred_check
      _
    $region23: #{tpu_custom_call.1} parent=1 // pred_check_branch
      %24 = sbr.rel (0) target = $region25
    $region24: #{tpu_custom_call.1} parent=1 // pred_region
      _
    $region25: #{tpu_custom_call.1} parent=1 // pred_fallthru
      _
    // Predicated region
    $region26: #{tpu_custom_call.1} parent=1 // pred_check
      _
    $region27: #{tpu_custom_call.1} parent=1 // pred_check_branch
      %26 = sbr.rel (0) target = $region29
    $region28: #{tpu_custom_call.1} parent=1 // pred_region
      _
    $region29: #{tpu_custom_call.1} parent=1 // pred_fallthru
      _
    %v27 = vld [vmem:[%s0] sm:$0xff]
    %v28 = vld [vmem:[%s1] sm:$0xff]
    %v29 = vld [vmem:[%s1 + $0x8] sm:$0xff]
    %v30 = vld [vmem:[%s1 + $0x10] sm:$0xff]
    %v31 = vld [vmem:[%s1 + $0x18] sm:$0xff]
    %v32 = vld [vmem:[%s6] sm:$0x1]
    %v33 = vperm.slane %v32, 0
    %vm34 = vcmask 261120
    %v36 = vsel %vm34, %v27, 0
    %38 = vmatpush.msra.mxu0 0.0
    %39 = vmatpush.msra.mxu0 0.0
    %40 = vmatpush.msra.mxu0 0.0
    %41 = vmatpush.msra.mxu0 0.0
    %42 = vmatpush.msra.mxu0 0.0
    %43 = vmatpush.msra.mxu0 0.0
    %44 = vmatpush.msra.mxu0 0.0
    %45 = vmatpush.msra.mxu0 0.0
    %46 = vmatpush.msra.mxu0 0.0
    %47 = vmatpush.msra.mxu0 0.0
    %48 = vmatpush.msra.mxu0 0.0
    %49 = vmatpush.msra.mxu0 0.0
    %50 = vmatpush.msra.mxu0 %v31
    %51 = vmatpush.msra.mxu0 %v30
    %52 = vmatpush.msra.mxu0 %v29
    %53 = vmatpush.msra.mxu0 %v28
    %54 = vmatmul.f32.gmra.mxu0 %v36
    %v55 = vpop.f32.mrf.mxu0
    %v56 = vadd.f32 %v33, %v55
    %57 = vdwg.mxu0
    %v58 = vmax.f32 %v56, 0.0
    %v59 = vld [vmem:[%s2] sm:$0xff]
    %v60 = vld [vmem:[%s2 + $0x8] sm:$0xff]
    %v61 = vld [vmem:[%s2 + $0x10] sm:$0xff]
    %v62 = vld [vmem:[%s2 + $0x18] sm:$0xff]
    %v63 = vld [vmem:[%s2 + $0x20] sm:$0xff]
    %v64 = vld [vmem:[%s2 + $0x28] sm:$0xff]
    %v65 = vld [vmem:[%s2 + $0x30] sm:$0xff]
    %v66 = vld [vmem:[%s2 + $0x38] sm:$0xff]
    %v67 = vld [vmem:[%s6 + $0x1] sm:$0x1]
    %v68 = vperm.slane %v67, 0
    %vm69 = vcmask 523264
    %v71 = vsel %vm69, %v58, 0
    %73 = vmatpush.msra.mxu0 0.0
    %74 = vmatpush.msra.mxu0 0.0
    %75 = vmatpush.msra.mxu0 0.0
    %76 = vmatpush.msra.mxu0 0.0
    %77 = vmatpush.msra.mxu0 0.0
    %78 = vmatpush.msra.mxu0 0.0
    %79 = vmatpush.msra.mxu0 0.0
    %80 = vmatpush.msra.mxu0 0.0
    %81 = vmatpush.msra.mxu0 %v66
    %82 = vmatpush.msra.mxu0 %v65
    %83 = vmatpush.msra.mxu0 %v64
    %84 = vmatpush.msra.mxu0 %v63
    %85 = vmatpush.msra.mxu0 %v62
    %86 = vmatpush.msra.mxu0 %v61
    %87 = vmatpush.msra.mxu0 %v60
    %88 = vmatpush.msra.mxu0 %v59
    %89 = vmatmul.f32.gmra.mxu0 %v71
    %v90 = vpop.f32.mrf.mxu0
    %v91 = vadd.f32 %v68, %v90
    %92 = vdwg.mxu0
    %v93 = vmax.f32 %v91, 0.0
    %v94 = vld [vmem:[%s3] sm:$0xff]
    %v95 = vld [vmem:[%s3 + $0x8] sm:$0xff]
    %v96 = vld [vmem:[%s3 + $0x10] sm:$0xff]
    %v97 = vld [vmem:[%s3 + $0x18] sm:$0xff]
    %v98 = vld [vmem:[%s6 + $0x2] sm:$0x1]
    %v99 = vperm.slane %v98, 0
    %v101 = vsel %vm34, %v93, 0
    %103 = vmatpush.msra.mxu0 0.0
    %104 = vmatpush.msra.mxu0 0.0
    %105 = vmatpush.msra.mxu0 0.0
    %106 = vmatpush.msra.mxu0 0.0
    %107 = vmatpush.msra.mxu0 0.0
    %108 = vmatpush.msra.mxu0 0.0
    %109 = vmatpush.msra.mxu0 0.0
    %110 = vmatpush.msra.mxu0 0.0
    %111 = vmatpush.msra.mxu0 0.0
    %112 = vmatpush.msra.mxu0 0.0
    %113 = vmatpush.msra.mxu0 0.0
    %114 = vmatpush.msra.mxu0 0.0
    %115 = vmatpush.msra.mxu0 %v97
    %116 = vmatpush.msra.mxu0 %v96
    %117 = vmatpush.msra.mxu0 %v95
    %118 = vmatpush.msra.mxu0 %v94
    %119 = vmatmul.f32.gmra.mxu0 %v101
    %v120 = vpop.f32.mrf.mxu0
    %v121 = vadd.f32 %v99, %v120
    %122 = vdwg.mxu0
    %v123 = vld [vmem:[%s4] sm:$0xff]
    %v124 = vld [vmem:[%s4 + $0x8] sm:$0xff]
    %v125 = vld [vmem:[%s6 + $0x3] sm:$0x1]
    %v126 = vperm.slane %v125, 0
    %vm127 = vcmask 130048
    %v129 = vsel %vm127, %v121, 0
    %131 = vmatpush.msra.mxu0 0.0
    %132 = vmatpush.msra.mxu0 0.0
    %133 = vmatpush.msra.mxu0 0.0
    %134 = vmatpush.msra.mxu0 0.0
    %135 = vmatpush.msra.mxu0 0.0
    %136 = vmatpush.msra.mxu0 0.0
    %137 = vmatpush.msra.mxu0 0.0
    %138 = vmatpush.msra.mxu0 0.0
    %139 = vmatpush.msra.mxu0 0.0
    %140 = vmatpush.msra.mxu0 0.0
    %141 = vmatpush.msra.mxu0 0.0
    %142 = vmatpush.msra.mxu0 0.0
    %143 = vmatpush.msra.mxu0 0.0
    %144 = vmatpush.msra.mxu0 0.0
    %145 = vmatpush.msra.mxu0 %v124
    %146 = vmatpush.msra.mxu0 %v123
    %147 = vmatmul.f32.gmra.mxu0 %v129
    %v148 = vpop.f32.mrf.mxu0
    %v149 = vadd.f32 %v126, %v148
    %150 = vdwg.mxu0
    %v151 = vmax.f32 %v149, 0.0
    %v152 = vld [vmem:[%s5] sm:$0xff]
    %v153 = vld [vmem:[%s5 + $0x8] sm:$0xff]
    %v154 = vld [vmem:[%s5 + $0x10] sm:$0xff]
    %v155 = vld [vmem:[%s5 + $0x18] sm:$0xff]
    %v156 = vld [vmem:[%s5 + $0x20] sm:$0xff]
    %v157 = vld [vmem:[%s5 + $0x28] sm:$0xff]
    %v158 = vld [vmem:[%s5 + $0x30] sm:$0xff]
    %v159 = vld [vmem:[%s5 + $0x38] sm:$0xff]
    %v160 = vld [vmem:[%s6 + $0x4] sm:$0x1]
    %v161 = vperm.slane %v160, 0
    %v163 = vsel %vm69, %v151, 0
    %165 = vmatpush.msra.mxu0 0.0
    %166 = vmatpush.msra.mxu0 0.0
    %167 = vmatpush.msra.mxu0 0.0
    %168 = vmatpush.msra.mxu0 0.0
    %169 = vmatpush.msra.mxu0 0.0
    %170 = vmatpush.msra.mxu0 0.0
    %171 = vmatpush.msra.mxu0 0.0
    %172 = vmatpush.msra.mxu0 0.0
    %173 = vmatpush.msra.mxu0 %v159
    %174 = vmatpush.msra.mxu0 %v158
    %175 = vmatpush.msra.mxu0 %v157
    %176 = vmatpush.msra.mxu0 %v156
    %177 = vmatpush.msra.mxu0 %v155
    %178 = vmatpush.msra.mxu0 %v154
    %179 = vmatpush.msra.mxu0 %v153
    %180 = vmatpush.msra.mxu0 %v152
    %181 = vmatmul.f32.gmra.mxu0 %v163
    %v182 = vpop.f32.mrf.mxu0
    %v183 = vadd.f32 %v161, %v182
    %184 = vdwg.mxu0
    %v185 = vtanh.pop %v183
    %186 = vrot.lane.b32.xlu0 %v121, 32
    %v187 = vpop.permute.xlu0 %186
    %v189 = vsel %vm34, %v185, %v187
    %190 = vst.msk [vmem:[#allocation2] sm:$0xff] %vm69, %v189
    // Predicated region
    $region30: #{tpu_custom_call.1} parent=1 // pred_check
      _
    $region31: #{tpu_custom_call.1} parent=1 // pred_check_branch
      %192 = sbr.rel (0) target = $region33
    $region32: #{tpu_custom_call.1} parent=1 // pred_region
      %194 = vsyncadd [#allocation3], 96
      %s195 = sshll.u32 [#allocation2], 4
      %s196 = int_to_ptr.vmem [resolvable:$true] %s195
      %s197 = sshll.u32 %s7, 4
      %s198 = int_to_ptr.hbm [resolvable:$true] %s197
      %203 = dma.vmem_to_hbm [thread:$0]  %s196, 32, %s198, [#allocation3], 32, 32, 2
    $region33: #{tpu_custom_call.1} parent=1 // pred_fallthru
      _
    // Predicated region
    $region34: #{tpu_custom_call.1} parent=1 // pred_check
      _
    $region35: #{tpu_custom_call.1} parent=1 // pred_check_branch
      %205 = sbr.rel (0) target = $region37
    $region36: #{tpu_custom_call.1} parent=1 // pred_region
      %207 = dma.done [#allocation3], 128
    $region37: #{tpu_custom_call.1} parent=1 // pred_fallthru
      _
    %208 = vsyncpa [#allocation3], 1

// kernel: tpu_custom_call.1
$region0: #{tpu_custom_call.1}
  #allocation0 [shape = 'u32[]', space=smem, size = 0x4, offset = 0x4, fixed_abs, tag = 'smem constant byte address 0x4 - core index']
  #allocation1 [shape = 'u32[72,128]{1,0:T(1,128)}', space=vmem, size = 0x9000, scoped, tag = 'internal scratch']
  %s0 = inlined_call_operand.vmem [shape: f32[2,32], index: 0, kind: input, shape index: {}]
  %s1 = inlined_call_operand.vmem [shape: f32[32,64], index: 1, kind: input, shape index: {}]
  %s2 = inlined_call_operand.vmem [shape: f32[64,32], index: 2, kind: input, shape index: {}]
  %s3 = inlined_call_operand.vmem [shape: f32[32,32], index: 3, kind: input, shape index: {}]
  %s4 = inlined_call_operand.vmem [shape: f32[16,64], index: 4, kind: input, shape index: {}]
  %s5 = inlined_call_operand.vmem [shape: f32[64,32], index: 5, kind: input, shape index: {}]
  %s6 = inlined_call_operand.vmem [shape: f32[5,64], index: 6, kind: input, shape index: {}]
  %s7 = inlined_call_operand.hbm [shape: f32[2,64], index: 7, kind: output, shape index: {}]
  %s8 = sld [smem:[#allocation0]]
  $region38: #{tpu_custom_call.1} parent=0
    _
  %s10 = ssub.s32 1, %s8
  %s11 = scalar_select 0, %s10, %s8
  $region1: #{tpu_custom_call.1} parent=0
    #allocation2 [shape = 'u8[4096]{0}', space=vmem, size = 0x1000, scoped, tag = 'output window, operand 0, single buffered']
    #allocation3 [shape = 's32[1]{0}', space=sflag, size = 0x4, scoped, tag = 'scoped memory for tpu_custom_call.1']
    %12 = vsyncpa [#allocation3], 0
    // Predicated region
    $region2: #{tpu_custom_call.1} parent=1 // pred_check
      _
    $region3: #{tpu_custom_call.1} parent=1 // pred_check_branch
      %14 = sbr.rel (0) target = $region5
    $region4: #{tpu_custom_call.1} parent=1 // pred_region
      _
    $region5: #{tpu_custom_call.1} parent=1 // pred_fallthru
      _
    // Predicated region
    $region6: #{tpu_custom_call.1} parent=1 // pred_check
      _
    $region7: #{tpu_custom_call.1} parent=1 // pred_check_branch
      %16 = sbr.rel (0) target = $region9
    $region8: #{tpu_custom_call.1} parent=1 // pred_region
      _
    $region9: #{tpu_custom_call.1} parent=1 // pred_fallthru
      _
    // Predicated region
    $region10: #{tpu_custom_call.1} parent=1 // pred_check
      _
    $region11: #{tpu_custom_call.1} parent=1 // pred_check_branch
      %18 = sbr.rel (0) target = $region13
    $region12: #{tpu_custom_call.1} parent=1 // pred_region
      _
    $region13: #{tpu_custom_call.1} parent=1 // pred_fallthru
      _
    // Predicated region
    $region14: #{tpu_custom_call.1} parent=1 // pred_check
      _
    $region15: #{tpu_custom_call.1} parent=1 // pred_check_branch
      %20 = sbr.rel (0) target = $region17
    $region16: #{tpu_custom_call.1} parent=1 // pred_region
      _
    $region17: #{tpu_custom_call.1} parent=1 // pred_fallthru
      _
    // Predicated region
    $region18: #{tpu_custom_call.1} parent=1 // pred_check
      _
    $region19: #{tpu_custom_call.1} parent=1 // pred_check_branch
      %22 = sbr.rel (0) target = $region21
    $region20: #{tpu_custom_call.1} parent=1 // pred_region
      _
    $region21: #{tpu_custom_call.1} parent=1 // pred_fallthru
      _
    // Predicated region
    $region22: #{tpu_custom_call.1} parent=1 // pred_check
      _
    $region23: #{tpu_custom_call.1} parent=1 // pred_check_branch
      %24 = sbr.rel (0) target = $region25
    $region24: #{tpu_custom_call.1} parent=1 // pred_region
      _
    $region25: #{tpu_custom_call.1} parent=1 // pred_fallthru
      _
    // Predicated region
    $region26: #{tpu_custom_call.1} parent=1 // pred_check
      _
    $region27: #{tpu_custom_call.1} parent=1 // pred_check_branch
      %26 = sbr.rel (0) target = $region29
    $region28: #{tpu_custom_call.1} parent=1 // pred_region
      _
    $region29: #{tpu_custom_call.1} parent=1 // pred_fallthru
      _
    %v27 = vld [vmem:[%s0] sm:$0xff]
    %v28 = vld [vmem:[%s1] sm:$0xff]
    %v29 = vld [vmem:[%s1 + $0x8] sm:$0xff]
    %v30 = vld [vmem:[%s1 + $0x10] sm:$0xff]
    %v31 = vld [vmem:[%s1 + $0x18] sm:$0xff]
    %v32 = vld [vmem:[%s6] sm:$0x1]
    %v33 = vperm.slane %v32, 0
    %vm34 = vcmask 261120
    %v36 = vsel %vm34, %v27, 0
    %38 = vmatpush.msra.mxu0 0.0
    %39 = vmatpush.msra.mxu0 0.0
    %40 = vmatpush.msra.mxu0 0.0
    %41 = vmatpush.msra.mxu0 0.0
    %42 = vmatpush.msra.mxu0 0.0
    %43 = vmatpush.msra.mxu0 0.0
    %44 = vmatpush.msra.mxu0 0.0
    %45 = vmatpush.msra.mxu0 0.0
    %46 = vmatpush.msra.mxu0 0.0
    %47 = vmatpush.msra.mxu0 0.0
    %48 = vmatpush.msra.mxu0 0.0
    %49 = vmatpush.msra.mxu0 0.0
    %50 = vmatpush.msra.mxu0 %v31
    %51 = vmatpush.msra.mxu0 %v30
    %52 = vmatpush.msra.mxu0 %v29
    %53 = vmatpush.msra.mxu0 %v28
    %54 = vmatmul.f32.gmra.mxu0 %v36
    %v55 = vpop.f32.mrf.mxu0
    %v56 = vadd.f32 %v33, %v55
    %57 = vdwg.mxu0
    %v58 = vmax.f32 %v56, 0.0
    %v59 = vld [vmem:[%s2] sm:$0xff]
    %v60 = vld [vmem:[%s2 + $0x8] sm:$0xff]
    %v61 = vld [vmem:[%s2 + $0x10] sm:$0xff]
    %v62 = vld [vmem:[%s2 + $0x18] sm:$0xff]
    %v63 = vld [vmem:[%s2 + $0x20] sm:$0xff]
    %v64 = vld [vmem:[%s2 + $0x28] sm:$0xff]
    %v65 = vld [vmem:[%s2 + $0x30] sm:$0xff]
    %v66 = vld [vmem:[%s2 + $0x38] sm:$0xff]
    %v67 = vld [vmem:[%s6 + $0x1] sm:$0x1]
    %v68 = vperm.slane %v67, 0
    %vm69 = vcmask 523264
    %v71 = vsel %vm69, %v58, 0
    %73 = vmatpush.msra.mxu0 0.0
    %74 = vmatpush.msra.mxu0 0.0
    %75 = vmatpush.msra.mxu0 0.0
    %76 = vmatpush.msra.mxu0 0.0
    %77 = vmatpush.msra.mxu0 0.0
    %78 = vmatpush.msra.mxu0 0.0
    %79 = vmatpush.msra.mxu0 0.0
    %80 = vmatpush.msra.mxu0 0.0
    %81 = vmatpush.msra.mxu0 %v66
    %82 = vmatpush.msra.mxu0 %v65
    %83 = vmatpush.msra.mxu0 %v64
    %84 = vmatpush.msra.mxu0 %v63
    %85 = vmatpush.msra.mxu0 %v62
    %86 = vmatpush.msra.mxu0 %v61
    %87 = vmatpush.msra.mxu0 %v60
    %88 = vmatpush.msra.mxu0 %v59
    %89 = vmatmul.f32.gmra.mxu0 %v71
    %v90 = vpop.f32.mrf.mxu0
    %v91 = vadd.f32 %v68, %v90
    %92 = vdwg.mxu0
    %v93 = vmax.f32 %v91, 0.0
    %v94 = vld [vmem:[%s3] sm:$0xff]
    %v95 = vld [vmem:[%s3 + $0x8] sm:$0xff]
    %v96 = vld [vmem:[%s3 + $0x10] sm:$0xff]
    %v97 = vld [vmem:[%s3 + $0x18] sm:$0xff]
    %v98 = vld [vmem:[%s6 + $0x2] sm:$0x1]
    %v99 = vperm.slane %v98, 0
    %v101 = vsel %vm34, %v93, 0
    %103 = vmatpush.msra.mxu0 0.0
    %104 = vmatpush.msra.mxu0 0.0
    %105 = vmatpush.msra.mxu0 0.0
    %106 = vmatpush.msra.mxu0 0.0
    %107 = vmatpush.msra.mxu0 0.0
    %108 = vmatpush.msra.mxu0 0.0
    %109 = vmatpush.msra.mxu0 0.0
    %110 = vmatpush.msra.mxu0 0.0
    %111 = vmatpush.msra.mxu0 0.0
    %112 = vmatpush.msra.mxu0 0.0
    %113 = vmatpush.msra.mxu0 0.0
    %114 = vmatpush.msra.mxu0 0.0
    %115 = vmatpush.msra.mxu0 %v97
    %116 = vmatpush.msra.mxu0 %v96
    %117 = vmatpush.msra.mxu0 %v95
    %118 = vmatpush.msra.mxu0 %v94
    %119 = vmatmul.f32.gmra.mxu0 %v101
    %v120 = vpop.f32.mrf.mxu0
    %v121 = vadd.f32 %v99, %v120
    %122 = vdwg.mxu0
    %v123 = vld [vmem:[%s4] sm:$0xff]
    %v124 = vld [vmem:[%s4 + $0x8] sm:$0xff]
    %v125 = vld [vmem:[%s6 + $0x3] sm:$0x1]
    %v126 = vperm.slane %v125, 0
    %vm127 = vcmask 130048
    %v129 = vsel %vm127, %v121, 0
    %131 = vmatpush.msra.mxu0 0.0
    %132 = vmatpush.msra.mxu0 0.0
    %133 = vmatpush.msra.mxu0 0.0
    %134 = vmatpush.msra.mxu0 0.0
    %135 = vmatpush.msra.mxu0 0.0
    %136 = vmatpush.msra.mxu0 0.0
    %137 = vmatpush.msra.mxu0 0.0
    %138 = vmatpush.msra.mxu0 0.0
    %139 = vmatpush.msra.mxu0 0.0
    %140 = vmatpush.msra.mxu0 0.0
    %141 = vmatpush.msra.mxu0 0.0
    %142 = vmatpush.msra.mxu0 0.0
    %143 = vmatpush.msra.mxu0 0.0
    %144 = vmatpush.msra.mxu0 0.0
    %145 = vmatpush.msra.mxu0 %v124
    %146 = vmatpush.msra.mxu0 %v123
    %147 = vmatmul.f32.gmra.mxu0 %v129
    %v148 = vpop.f32.mrf.mxu0
    %v149 = vadd.f32 %v126, %v148
    %150 = vdwg.mxu0
    %v151 = vmax.f32 %v149, 0.0
    %v152 = vld [vmem:[%s5] sm:$0xff]
    %v153 = vld [vmem:[%s5 + $0x8] sm:$0xff]
    %v154 = vld [vmem:[%s5 + $0x10] sm:$0xff]
    %v155 = vld [vmem:[%s5 + $0x18] sm:$0xff]
    %v156 = vld [vmem:[%s5 + $0x20] sm:$0xff]
    %v157 = vld [vmem:[%s5 + $0x28] sm:$0xff]
    %v158 = vld [vmem:[%s5 + $0x30] sm:$0xff]
    %v159 = vld [vmem:[%s5 + $0x38] sm:$0xff]
    %v160 = vld [vmem:[%s6 + $0x4] sm:$0x1]
    %v161 = vperm.slane %v160, 0
    %v163 = vsel %vm69, %v151, 0
    %165 = vmatpush.msra.mxu0 0.0
    %166 = vmatpush.msra.mxu0 0.0
    %167 = vmatpush.msra.mxu0 0.0
    %168 = vmatpush.msra.mxu0 0.0
    %169 = vmatpush.msra.mxu0 0.0
    %170 = vmatpush.msra.mxu0 0.0
    %171 = vmatpush.msra.mxu0 0.0
    %172 = vmatpush.msra.mxu0 0.0
    %173 = vmatpush.msra.mxu0 %v159
    %174 = vmatpush.msra.mxu0 %v158
    %175 = vmatpush.msra.mxu0 %v157
    %176 = vmatpush.msra.mxu0 %v156
    %177 = vmatpush.msra.mxu0 %v155
    %178 = vmatpush.msra.mxu0 %v154
    %179 = vmatpush.msra.mxu0 %v153
    %180 = vmatpush.msra.mxu0 %v152
    %181 = vmatmul.f32.gmra.mxu0 %v163
    %v182 = vpop.f32.mrf.mxu0
    %v183 = vadd.f32 %v161, %v182
    %184 = vdwg.mxu0
    %v185 = vtanh.pop %v183
    %186 = vrot.lane.b32.xlu0 %v121, 32
    %v187 = vpop.permute.xlu0 %186
    %v189 = vsel %vm34, %v185, %v187
    %190 = vst.msk [vmem:[#allocation2] sm:$0xff] %vm69, %v189
    // Predicated region
    $region30: #{tpu_custom_call.1} parent=1 // pred_check
      _
    $region31: #{tpu_custom_call.1} parent=1 // pred_check_branch
      %192 = sbr.rel (0) target = $region33
    $region32: #{tpu_custom_call.1} parent=1 // pred_region
      %194 = vsyncadd [#allocation3], 96
      %s195 = sshll.u32 [#allocation2], 4
      %s196 = int_to_ptr.vmem [resolvable:$true] %s195
      %s197 = sshll.u32 %s7, 4
      %s198 = int_to_ptr.hbm [resolvable:$true] %s197
      %203 = dma.vmem_to_hbm [thread:$0]  %s196, 32, %s198, [#allocation3], 32, 32, 2
    $region33: #{tpu_custom_call.1} parent=1 // pred_fallthru
      _
    // Predicated region
    $region34: #{tpu_custom_call.1} parent=1 // pred_check
      _
    $region35: #{tpu_custom_call.1} parent=1 // pred_check_branch
      %205 = sbr.rel (0) target = $region37
    $region36: #{tpu_custom_call.1} parent=1 // pred_region
      %207 = dma.done [#allocation3], 128
    $region37: #{tpu_custom_call.1} parent=1 // pred_fallthru
      _
    %208 = vsyncpa [#allocation3], 1

</llo_original>
